<compile_context>
chip_gen: v7x
topology: tpu7x:2x2x1
jax: 0.10.0
libtpu: 0.0.40
codegen_flags: <defaults>
</compile_context>

<pallas_src>
import math

import jax
import jax.numpy as jnp
from jax.experimental import pallas as pl
from jax.experimental.pallas import tpu as pltpu


def _sigm_alpha_kernel(params_ref, x_ref, o_ref):
    # params_ref: SMEM (2,) float32 = [0.5 * alpha, log(n_pixels)]
    half_alpha = params_ref[0]
    log_n = params_ref[1]
    x = x_ref[...].astype(jnp.float32)
    # 2/(1+exp(-a*(x+c))) - 1 == tanh(0.5*a*(x+c)): one EUP op, no exp overflow.
    o_ref[...] = jnp.tanh(half_alpha * (x + log_n)).astype(o_ref.dtype)


def _sublane_multiple(dtype) -> int:
    itemsize = jnp.dtype(dtype).itemsize
    return {4: 8, 2: 16, 1: 32}.get(itemsize, 8)


_MAX_COLS = 8192


def _best_cols(total: int) -> int:
    """Widest last dim (<= _MAX_COLS) that divides the element count.

    Prefer multiples of 128 (fully unmasked wide vector stores); otherwise the
    widest plain divisor so rows stay long and DMAs contiguous.
    """
    for cand in range(_MAX_COLS, 127, -128):
        if total % cand == 0:
            return cand
    for cand in range(min(total, _MAX_COLS), 0, -1):
        if total % cand == 0:
            return cand
    return 1


def _chip_config():
    """(target_tile_bytes, vmem_limit_bytes, min_grid_steps), generation-aware."""
    # Conservative (v7x-safe) defaults: 64 MiB physical VMEM, 2 TensorCores.
    tile_bytes = 4 * 1024 * 1024
    vmem_limit = 32 * 1024 * 1024
    min_steps = 8  # keep the "parallel" grid axis splittable across the 2 TCs
    try:
        info = pltpu.get_tpu_info()
        vmem_cap = getattr(info, "vmem_capacity_bytes", None)
        if vmem_cap is not None and vmem_cap >= 96 * 1024 * 1024:
            # v5e / v6e: 128 MiB physical VMEM, single TensorCore per chip.
            tile_bytes = 8 * 1024 * 1024
            vmem_limit = 64 * 1024 * 1024
            min_steps = 1
    except Exception:
        pass  # keep conservative defaults if HW query is unavailable
    return tile_bytes, vmem_limit, min_steps


def sigm_alpha_pallas(x: jax.Array, alpha) -> jax.Array:
    """Elementwise SIGMalpha forward. Spatial dims are the last two axes."""
    h, w = x.shape[-2], x.shape[-1]
    log_n_pixels = math.log(h * w)  # static: derived purely from the shape
    # Trace-safe scalar params: alpha may be a python float OR a traced runtime
    # scalar (no recompile per alpha value).
    half_alpha = 0.5 * jnp.asarray(alpha, dtype=jnp.float32)
    params = jnp.stack([half_alpha, jnp.float32(log_n_pixels)])

    orig_shape = x.shape
    dtype = x.dtype
    itemsize = jnp.dtype(dtype).itemsize
    total = x.size
    sub = _sublane_multiple(dtype)

    tile_bytes, vmem_limit, min_steps = _chip_config()

    # Flatten to a lane-dense 2-D slab (free metadata reshape of contiguous data).
    cols = _best_cols(total)
    rows = total // cols
    x2d = x.reshape(rows, cols)

    # Rows per tile: biggest sublane-aligned tile near the per-buffer target,
    # but (on v7x) keep >= min_steps grid steps so both TensorCores stay busy.
    tr = max(sub, (tile_bytes // (cols * itemsize) // sub) * sub)
    if tr >= rows:
        tr = rows  # block dim == full dim -> exempt from the (8,128) rule
    elif min_steps > 1:
        cap = (rows // min_steps // sub) * sub
        if cap >= sub:
            tr = min(tr, cap)

    out2d = pl.pallas_call(
        _sigm_alpha_kernel,
        out_shape=jax.ShapeDtypeStruct((rows, cols), dtype),
        grid=(pl.cdiv(rows, tr),),
        in_specs=[
            pl.BlockSpec(memory_space=pltpu.MemorySpace.SMEM),
            pl.BlockSpec((tr, cols), lambda i: (i, 0)),
        ],
        out_specs=pl.BlockSpec((tr, cols), lambda i: (i, 0)),
        compiler_params=pltpu.CompilerParams(
            dimension_semantics=("parallel",),
            vmem_limit_bytes=vmem_limit,
        ),
        cost_estimate=pl.CostEstimate(
            flops=2 * total,
            transcendentals=total,
            bytes_accessed=2 * total * itemsize,
        ),
    )(params, x2d)
    return out2d.reshape(orig_shape)


def sigm_alpha_ref(x, alpha):
    n_pixels = x.shape[-1] * x.shape[-2]
    return 2.0 / (1.0 + jnp.exp(-alpha * (x + jnp.log(jnp.float32(n_pixels))))) - 1.0


if __name__ == "__main__":
    key = jax.random.PRNGKey(0)
    alpha = 0.5

    # Primary: NCHW, matching the PyTorch module's convention.
    B, C, H, W = 2, 4, 16, 16
    x = jax.random.normal(key, (B, C, H, W), dtype=jnp.float32)
    out = jax.block_until_ready(sigm_alpha_pallas(x, alpha))
    ref = sigm_alpha_ref(x, alpha)
    assert out.shape == x.shape and out.dtype == x.dtype
    assert jnp.allclose(out, ref, atol=1e-5, rtol=1e-5), "mismatch vs reference"

    # Secondary: element count not a multiple of 128 (exercises divisor fallback).
    x2 = jax.random.normal(jax.random.PRNGKey(1), (3, 5, 7, 9), dtype=jnp.float32)
    out2 = jax.block_until_ready(sigm_alpha_pallas(x2, alpha))
    assert jnp.allclose(out2, sigm_alpha_ref(x2, alpha), atol=1e-5, rtol=1e-5)

    print("KERNEL_OK")
</pallas_src>

<mosaic_0001>
module attributes {stable_mosaic.version = 11 : i64} {
  func.func @_sigm_alpha_kernel(%arg0: i32, %arg1: memref<2xf32, #tpu.memory_space<smem>>, %arg2: memref<1x2048xf32, #tpu.memory_space<vmem>>, %arg3: memref<1x2048xf32, #tpu.memory_space<vmem>>) attributes {dimension_semantics = [#tpu.dimension_semantics<parallel>], iteration_bounds = array<i64: 1>, scalar_prefetch = 0 : i64, scratch_operands = 0 : i64, tpu.core_type = #tpu.core_type<tc>, window_params = [{transform_indices = @transform_0, window_bounds = array<i64: 2>}, {transform_indices = @transform_1, window_bounds = array<i64: 1, 2048>}, {transform_indices = @transform_2, window_bounds = array<i64: 1, 2048>}]} {
    %c0 = arith.constant 0 : index
    %0 = memref.load %arg1[%c0] : memref<2xf32, #tpu.memory_space<smem>>
    %c1 = arith.constant 1 : index
    %1 = memref.load %arg1[%c1] : memref<2xf32, #tpu.memory_space<smem>>
    %c0_0 = arith.constant 0 : index
    %c0_1 = arith.constant 0 : index
    %2 = vector.load %arg2[%c0_0, %c0_1] : memref<1x2048xf32, #tpu.memory_space<vmem>>, vector<1x2048xf32>
    %3 = vector.broadcast %1 : f32 to vector<1x2048xf32>
    %4 = arith.addf %2, %3 : vector<1x2048xf32>
    %5 = vector.broadcast %0 : f32 to vector<1x2048xf32>
    %6 = arith.mulf %5, %4 : vector<1x2048xf32>
    %7 = math.tanh %6 : vector<1x2048xf32>
    %c0_2 = arith.constant 0 : index
    %c0_3 = arith.constant 0 : index
    %8 = vector.load %arg3[%c0_2, %c0_3] : memref<1x2048xf32, #tpu.memory_space<vmem>>, vector<1x2048xf32>
    tpu.vector_store %arg3[%c0_2, %c0_3], %7 {strides = array<i32>} : memref<1x2048xf32, #tpu.memory_space<vmem>>, vector<1x2048xf32>,
    return
  }
  func.func @transform_0(%arg0: i32) -> i32 {
    %c0_i32 = arith.constant 0 : i32
    %c0_i32_0 = arith.constant 0 : i32
    return %c0_i32 : i32
  }
  func.func @transform_1(%arg0: i32) -> (i32, i32) {
    %c0_i32 = arith.constant 0 : i32
    %c0_i32_0 = arith.constant 0 : i32
    return %arg0, %c0_i32 : i32, i32
  }
  func.func @transform_2(%arg0: i32) -> (i32, i32) {
    %c0_i32 = arith.constant 0 : i32
    %c0_i32_0 = arith.constant 0 : i32
    return %arg0, %c0_i32 : i32, i32
  }
}

</mosaic_0001>

<llo_original>
// kernel: tpu_custom_call.1
$region0: #{tpu_custom_call.1}
  #allocation0 [shape = 'u32[]', space=smem, size = 0x4, offset = 0x4, fixed_abs, tag = 'smem constant byte address 0x4 - core index']
  #allocation1 [shape = 'u32[144,128]{1,0:T(1,128)}', space=vmem, size = 0x12000, scoped, tag = 'internal scratch']
  %s0 = inlined_call_operand.hbm [shape: f32[2], index: 0, kind: input, shape index: {}]
  %s1 = inlined_call_operand.hbm [shape: f32[1,2048], index: 1, kind: input, shape index: {}]
  %s2 = inlined_call_operand.hbm [shape: f32[1,2048], index: 2, kind: output, shape index: {}]
  %s3 = sld [smem:[#allocation0]]
  $region26: #{tpu_custom_call.1} parent=0
    _
  %s5 = ssub.s32 1, %s3
  %s6 = scalar_select 0, %s5, %s3
  $region1: #{tpu_custom_call.1} parent=0
    #allocation2 [shape = 'u8[512]{0}', space=smem, size = 0x200, scoped, tag = 'input window, operand 0, single buffered']
    #allocation3 [shape = 's32[1]{0}', space=sflag, size = 0x4, scoped, tag = 'scoped memory for tpu_custom_call.1']
    #allocation4 [shape = 's32[1]{0}', space=sflag, size = 0x4, scoped, tag = 'scoped memory for tpu_custom_call.1']
    #allocation5 [shape = 's32[1]{0}', space=sflag, size = 0x4, scoped, tag = 'scoped memory for tpu_custom_call.1']
    #allocation6 [shape = 'u8[8192]{0}', space=vmem, size = 0x2000, scoped, tag = 'input window, operand 1, single buffered']
    #allocation7 [shape = 'u8[8192]{0}', space=vmem, size = 0x2000, scoped, tag = 'output window, operand 0, single buffered']
    %7 = vsyncpa [#allocation5], 0
    %8 = vsyncpa [#allocation3], 0
    %9 = vsyncpa [#allocation4], 0
    // Predicated region
    $region2: #{tpu_custom_call.1} parent=1 // pred_check
      _
    $region3: #{tpu_custom_call.1} parent=1 // pred_check_branch
      %11 = sbr.rel (0) target = $region5
    $region4: #{tpu_custom_call.1} parent=1 // pred_region
      %s13 = ssub.s32 16, 16
      %14 = vsyncadd [#allocation5], %s13
      %17 = dma.hbm_to_smem %s0, 16, [#allocation2], [#allocation5]
    $region5: #{tpu_custom_call.1} parent=1 // pred_fallthru
      _
    // Predicated region
    $region6: #{tpu_custom_call.1} parent=1 // pred_check
      _
    $region7: #{tpu_custom_call.1} parent=1 // pred_check_branch
      %19 = sbr.rel (0) target = $region9
    $region8: #{tpu_custom_call.1} parent=1 // pred_region
      %s21 = ssub.s32 256, 256
      %22 = vsyncadd [#allocation3], %s21
      %s24 = sshll.u32 [#allocation6], 4
      %s25 = int_to_ptr.vmem [resolvable:$true] %s24
      %27 = dma.hbm_to_vmem [thread:$0]  %s1, 256, %s25, [#allocation3]
    $region9: #{tpu_custom_call.1} parent=1 // pred_fallthru
      _
    // Predicated region
    $region10: #{tpu_custom_call.1} parent=1 // pred_check
      _
    $region11: #{tpu_custom_call.1} parent=1 // pred_check_branch
      %29 = sbr.rel (0) target = $region13
    $region12: #{tpu_custom_call.1} parent=1 // pred_region
      %30 = dma.done [#allocation5], 16
    $region13: #{tpu_custom_call.1} parent=1 // pred_fallthru
      _
    // Predicated region
    $region14: #{tpu_custom_call.1} parent=1 // pred_check
      _
    $region15: #{tpu_custom_call.1} parent=1 // pred_check_branch
      %32 = sbr.rel (0) target = $region17
    $region16: #{tpu_custom_call.1} parent=1 // pred_region
      %33 = dma.done [#allocation3], 256
    $region17: #{tpu_custom_call.1} parent=1 // pred_fallthru
      _
    %34 = sfence
    %s35 = sld [smem:[#allocation2]]
    %s36 = sld [smem:[#allocation2 + $0x1]]
    %v37 = vld [vmem:[#allocation6] sm:$0xff]
    %v38 = vld [vmem:[#allocation6 + $0x8] sm:$0xff]
    %v39 = vstv %s36
    %v40 = vadd.f32 %v37, %v39
    %v41 = vadd.f32 %v38, %v39
    %v42 = vstv %s35
    %v43 = vmul.f32 %v42, %v40
    %v44 = vmul.f32 %v42, %v41
    %v45 = vtanh.pop %v43
    %v46 = vtanh.pop %v44
    %47 = vst [vmem:[#allocation7] sm:$0xff] %v45
    %48 = vst [vmem:[#allocation7 + $0x8] sm:$0xff] %v46
    // Predicated region
    $region18: #{tpu_custom_call.1} parent=1 // pred_check
      _
    $region19: #{tpu_custom_call.1} parent=1 // pred_check_branch
      %50 = sbr.rel (0) target = $region21
    $region20: #{tpu_custom_call.1} parent=1 // pred_region
      %s52 = ssub.s32 256, 256
      %53 = vsyncadd [#allocation4], %s52
      %s55 = sshll.u32 [#allocation7], 4
      %s56 = int_to_ptr.vmem [resolvable:$true] %s55
      %58 = dma.vmem_to_hbm [thread:$0]  %s56, 256, %s2, [#allocation4]
    $region21: #{tpu_custom_call.1} parent=1 // pred_fallthru
      _
    // Predicated region
    $region22: #{tpu_custom_call.1} parent=1 // pred_check
      _
    $region23: #{tpu_custom_call.1} parent=1 // pred_check_branch
      %60 = sbr.rel (0) target = $region25
    $region24: #{tpu_custom_call.1} parent=1 // pred_region
      %61 = dma.done [#allocation4], 256
    $region25: #{tpu_custom_call.1} parent=1 // pred_fallthru
      _
    %62 = vsyncpa [#allocation3], 1
    %63 = vsyncpa [#allocation4], 1
    %64 = vsyncpa [#allocation5], 1

</llo_original>
